<compile_context>
chip_gen: v6e
topology: v6e:2x2x1
jax: 0.10.0
libtpu: 0.0.40
codegen_flags: <defaults>
</compile_context>

<pallas_src>
import functools

import jax
import jax.numpy as jnp
from jax import lax
from jax.experimental import pallas as pl
from jax.experimental.pallas import tpu as pltpu


def _round_up(v: int, m: int) -> int:
    return (v + m - 1) // m * m


def _conv_sigmoid_gate(mean_1c, w_ref, k_size: int):
    """mean_1c: (1, C) f32 channel means -> (1, C) f32 sigmoid(conv1d(mean))."""
    c = mean_1c.shape[-1]
    pad = (k_size - 1) // 2
    if pad > 0:
        zeros = jnp.zeros((1, pad), jnp.float32)
        y_pad = jnp.concatenate([zeros, mean_1c, zeros], axis=-1)   # pad once
    else:
        y_pad = mean_1c
    z = jnp.zeros_like(mean_1c)
    for j in range(k_size):                                         # static slices
        z = z + w_ref[j] * y_pad[:, j:j + c]
    return jax.nn.sigmoid(z)


def _fold_back_sum(acc_1w, c: int, r: int):
    """(1, r*C) f32 lane-folded sums -> (1, C) f32 channel sums."""
    csum = jnp.zeros((1, c), jnp.float32)
    for j in range(r):                                              # r <= 4 typically
        csum = csum + acc_1w[:, j * c:(j + 1) * c]
    return csum


def _tile_gate(gate_1c, r: int):
    """(1, C) -> (1, r*C): gate value at lane j*C + c is gate[c]."""
    return gate_1c if r == 1 else jnp.concatenate([gate_1c] * r, axis=-1)


# ----------------------------------------------------------------------------
# Fused single-pass kernel (primary path): 1 HBM read + 1 HBM write of x.
# ----------------------------------------------------------------------------
def _eca_fused_kernel(w_ref, x_ref, o_ref, *, k_size: int, c: int, r: int,
                      n_valid: int):
    """w_ref : SMEM (k,) f32 conv weight
       x_ref : VMEM (Nf, r*C) input slab (native dtype)
       o_ref : VMEM (Nf, r*C) output slab
    """
    # f32 channel sums over the whole (folded) sequence.
    s = jnp.sum(x_ref[...], axis=0, keepdims=True, dtype=jnp.float32)  # (1, r*C)
    mean = _fold_back_sum(s, c, r) * jnp.float32(1.0 / n_valid)        # (1, C)
    gate = _conv_sigmoid_gate(mean, w_ref, k_size)                     # (1, C) f32
    gate_w = _tile_gate(gate, r).astype(o_ref.dtype)                   # (1, r*C)
    o_ref[...] = x_ref[...] * gate_w


# ----------------------------------------------------------------------------
# Fallback two-phase path (very large N): phase 1 gate, phase 2 scale.
# ----------------------------------------------------------------------------
def _eca_gate_kernel(w_ref, x_ref, g_ref, acc_ref, *, k_size: int, c: int,
                     r: int, n_valid: int, n_rows_total: int, ragged: bool):
    """Phase 1: accumulate channel sums over N tiles, finalize conv+sigmoid.

    w_ref  : SMEM (k,) f32
    x_ref  : VMEM (n_tile, r*C) input tile (native dtype)
    g_ref  : VMEM (1, r*C) gate output (x dtype), resident across the N axis
    acc_ref: VMEM (1, r*C) f32 running sums (scratch)
    """
    n = pl.program_id(1)
    n_tile = x_ref.shape[0]

    @pl.when(n == 0)
    def _init():
        acc_ref[...] = jnp.zeros_like(acc_ref)

    x = x_ref[...]
    if ragged:
        # Last tile may read past the array; OOB rows are undefined -> mask.
        row = lax.broadcasted_iota(jnp.int32, x.shape, 0)
        valid = n_rows_total - n * n_tile
        x = jnp.where(row < valid, x, jnp.zeros_like(x))
    acc_ref[...] += jnp.sum(x, axis=0, keepdims=True, dtype=jnp.float32)

    @pl.when(n == pl.num_programs(1) - 1)
    def _finalize():
        mean = _fold_back_sum(acc_ref[...], c, r) * jnp.float32(1.0 / n_valid)
        gate = _conv_sigmoid_gate(mean, w_ref, k_size)
        g_ref[...] = _tile_gate(gate, r).astype(g_ref.dtype)


def _eca_scale_kernel(x_ref, g_ref, o_ref):
    """Phase 2: out = x * gate (ragged tail stores are masked by Pallas)."""
    o_ref[...] = x_ref[...] * g_ref[...]


# ----------------------------------------------------------------------------
# Wrapper
# ----------------------------------------------------------------------------
def eca_layer_1d_forward(x: jax.Array, weight: jax.Array, *,
                         fused_slab_limit_bytes: int = 8 * 1024 * 1024,
                         tile_target_bytes: int = 1 * 1024 * 1024,
                         vmem_limit_bytes: int = 40 * 1024 * 1024) -> jax.Array:
    """x: (B, N, C); weight: (k,) Conv1d(1, 1, k, bias=False) weight[0, 0, :]."""
    B, N, C = x.shape
    k_size = int(weight.shape[0])
    # PyTorch padding=(k-1)//2 is "same" only for odd k; ECA always uses odd k.
    assert k_size % 2 == 1, "eca_layer_1d requires an odd k_size"
    weight = weight.astype(jnp.float32)

    # Fold channels into the lane dim: largest r <= 128//C that divides N.
    r_max = max(1, 128 // C)
    r = 1
    for cand in range(min(r_max, N), 0, -1):
        if N % cand == 0:
            r = cand
            break
    cw = r * C
    nf = N // r
    itemsize = x.dtype.itemsize
    x_f = x.reshape(B, nf, cw)          # contiguous reshape: free in XLA

    cp_fused = pltpu.CompilerParams(dimension_semantics=("parallel",),
                                    vmem_limit_bytes=vmem_limit_bytes)

    slab_bytes = nf * cw * itemsize
    if slab_bytes <= fused_slab_limit_bytes:
        # -------- Fused single-pass path: grid over batch only. --------
        out = pl.pallas_call(
            functools.partial(_eca_fused_kernel, k_size=k_size, c=C, r=r,
                              n_valid=N),
            out_shape=jax.ShapeDtypeStruct((B, nf, cw), x.dtype),
            grid=(B,),
            in_specs=[
                pl.BlockSpec(memory_space=pltpu.SMEM),                 # conv weight
                pl.BlockSpec((None, nf, cw), lambda b: (b, 0, 0)),     # x slab
            ],
            out_specs=pl.BlockSpec((None, nf, cw), lambda b: (b, 0, 0)),
            compiler_params=cp_fused,
        )(weight, x_f)
        return out.reshape(B, N, C)

    # -------- Fallback two-phase path for very large N. --------
    row_bytes = cw * itemsize
    n_tile = max(16, (tile_target_bytes // row_bytes) // 16 * 16)
    n_tile = min(n_tile, _round_up(nf, 16))
    num_n = pl.cdiv(nf, n_tile)
    ragged = (nf % n_tile) != 0

    gate = pl.pallas_call(
        functools.partial(_eca_gate_kernel, k_size=k_size, c=C, r=r, n_valid=N,
                          n_rows_total=nf, ragged=ragged),
        out_shape=jax.ShapeDtypeStruct((B, 1, cw), x.dtype),
        grid=(B, num_n),
        in_specs=[
            pl.BlockSpec(memory_space=pltpu.SMEM),                         # conv weight
            pl.BlockSpec((None, n_tile, cw), lambda b, n: (b, n, 0)),      # x tile
        ],
        out_specs=pl.BlockSpec((None, 1, cw), lambda b, n: (b, 0, 0)),
        scratch_shapes=[pltpu.VMEM((1, cw), jnp.float32)],
        compiler_params=pltpu.CompilerParams(
            dimension_semantics=("parallel", "arbitrary"),
            vmem_limit_bytes=vmem_limit_bytes),
    )(weight, x_f)

    out = pl.pallas_call(
        _eca_scale_kernel,
        out_shape=jax.ShapeDtypeStruct((B, nf, cw), x.dtype),
        grid=(B, num_n),
        in_specs=[
            pl.BlockSpec((None, n_tile, cw), lambda b, n: (b, n, 0)),      # x tile
            pl.BlockSpec((None, 1, cw), lambda b, n: (b, 0, 0)),           # gate
        ],
        out_specs=pl.BlockSpec((None, n_tile, cw), lambda b, n: (b, n, 0)),
        compiler_params=pltpu.CompilerParams(
            dimension_semantics=("parallel", "parallel"),
            vmem_limit_bytes=vmem_limit_bytes),
    )(x_f, gate)

    return out.reshape(B, N, C)


def _reference(x: jax.Array, weight: jax.Array) -> jax.Array:
    """Pure-JAX reference mirroring the PyTorch eca_layer_1d forward."""
    B, N, C = x.shape
    k = weight.shape[0]
    pad = (k - 1) // 2
    y = x.mean(axis=1)                                   # (B, C)
    y_pad = jnp.pad(y, ((0, 0), (pad, pad)))             # (B, C + 2*pad)
    z = sum(weight[j] * y_pad[:, j:j + C] for j in range(k))
    gate = jax.nn.sigmoid(z)                             # (B, C)
    return x * gate[:, None, :]


# TODO(synk): the rest of SparseTransformerBlock (WindowAttention, LayerNorm,
# MLP, window partition/shift) is not implemented here; its WindowAttention
# depends on an `SE(48)` module that is undefined in the provided spec.

if __name__ == "__main__":
    key = jax.random.PRNGKey(0)
    kw, kx1, kx2, kx3 = jax.random.split(key, 4)

    # Conv1d(1, 1, k, bias=False)-style deterministic init (bound = 1/sqrt(k)).
    k_size = 3
    bound = 1.0 / (k_size ** 0.5)
    weight = jax.random.uniform(kw, (k_size,), dtype=jnp.float32,
                                minval=-bound, maxval=bound)

    # Case 1: fused single-pass path (LeFF-like: dim=32, 16x16 tokens), r=4.
    B, N, C = 2, 256, 32
    x1 = jax.random.normal(kx1, (B, N, C), dtype=jnp.float32)
    out1 = jax.block_until_ready(eca_layer_1d_forward(x1, weight))
    assert out1.shape == (B, N, C)
    assert jnp.allclose(out1, _reference(x1, weight), atol=1e-5, rtol=1e-5), \
        "mismatch vs reference (fused path)"

    # Case 2: fused path with a non-power-of-two fold (N=63 -> r=3, 96 lanes).
    x2 = jax.random.normal(kx2, (2, 63, 32), dtype=jnp.float32)
    out2 = jax.block_until_ready(eca_layer_1d_forward(x2, weight))
    assert jnp.allclose(out2, _reference(x2, weight), atol=1e-5, rtol=1e-5), \
        "mismatch vs reference (fused path, r=3)"

    # Case 3: force the two-phase tiled path with a ragged last N tile
    # (N=200 -> Nf=50, n_tile=16 -> 4 tiles, last tile masked in-kernel).
    x3 = jax.random.normal(kx3, (2, 200, 32), dtype=jnp.float32)
    out3 = jax.block_until_ready(
        eca_layer_1d_forward(x3, weight,
                             fused_slab_limit_bytes=1024,
                             tile_target_bytes=16 * 128 * 4))
    assert jnp.allclose(out3, _reference(x3, weight), atol=1e-5, rtol=1e-5), \
        "mismatch vs reference (tiled ragged path)"

    print("KERNEL_OK")
</pallas_src>

<mosaic_0001>
module attributes {stable_mosaic.version = 11 : i64} {
  func.func @_eca_fused_kernel(%arg0: i32, %arg1: memref<3xf32, #tpu.memory_space<smem>>, %arg2: memref<1x64x128xf32, #tpu.memory_space<vmem>>, %arg3: memref<1x64x128xf32, #tpu.memory_space<vmem>>) attributes {dimension_semantics = [#tpu.dimension_semantics<parallel>], iteration_bounds = array<i64: 2>, scalar_prefetch = 0 : i64, scratch_operands = 0 : i64, tpu.core_type = #tpu.core_type<tc>, window_params = [{transform_indices = @transform_0, window_bounds = array<i64: 3>}, {transform_indices = @transform_1, window_bounds = array<i64: 1, 64, 128>}, {transform_indices = @transform_2, window_bounds = array<i64: 1, 64, 128>}]} {
    %c0 = arith.constant 0 : index
    %c0_0 = arith.constant 0 : index
    %c0_1 = arith.constant 0 : index
    %0 = vector.load %arg2[%c0, %c0_0, %c0_1] : memref<1x64x128xf32, #tpu.memory_space<vmem>>, vector<1x64x128xf32>
    %1 = vector.shape_cast %0 : vector<1x64x128xf32> to vector<64x128xf32>
    %cst = arith.constant dense<0.000000e+00> : vector<128xf32>
    %2 = vector.multi_reduction <add>, %1, %cst [0] : vector<64x128xf32> to vector<128xf32>
    %3 = vector.shape_cast %2 : vector<128xf32> to vector<1x128xf32>
    %cst_2 = arith.constant 0.000000e+00 : f32
    %4 = vector.broadcast %cst_2 : f32 to vector<1x32xf32>
    %5 = vector.extract_strided_slice %3 {offsets = [0, 0], sizes = [1, 32], strides = [1, 1]} : vector<1x128xf32> to vector<1x32xf32>
    %6 = arith.addf %4, %5 : vector<1x32xf32>
    %7 = vector.extract_strided_slice %3 {offsets = [0, 32], sizes = [1, 32], strides = [1, 1]} : vector<1x128xf32> to vector<1x32xf32>
    %8 = arith.addf %6, %7 : vector<1x32xf32>
    %9 = vector.extract_strided_slice %3 {offsets = [0, 64], sizes = [1, 32], strides = [1, 1]} : vector<1x128xf32> to vector<1x32xf32>
    %10 = arith.addf %8, %9 : vector<1x32xf32>
    %11 = vector.extract_strided_slice %3 {offsets = [0, 96], sizes = [1, 32], strides = [1, 1]} : vector<1x128xf32> to vector<1x32xf32>
    %12 = arith.addf %10, %11 : vector<1x32xf32>
    %cst_3 = arith.constant 3.906250e-03 : f32
    %13 = vector.broadcast %cst_3 : f32 to vector<1x32xf32>
    %14 = arith.mulf %12, %13 : vector<1x32xf32>
    %cst_4 = arith.constant 0.000000e+00 : f32
    %15 = vector.broadcast %cst_4 : f32 to vector<1x1xf32>
    %16 = tpu.concatenate %15, %14, %15 in 1 : vector<1x1xf32>, vector<1x32xf32>, vector<1x1xf32> -> vector<1x34xf32>
    %cst_5 = arith.constant 0.000000e+00 : f32
    %17 = vector.broadcast %cst_5 : f32 to vector<1x32xf32>
    %c0_6 = arith.constant 0 : index
    %18 = memref.load %arg1[%c0_6] : memref<3xf32, #tpu.memory_space<smem>>
    %19 = vector.extract_strided_slice %16 {offsets = [0, 0], sizes = [1, 32], strides = [1, 1]} : vector<1x34xf32> to vector<1x32xf32>
    %20 = vector.broadcast %18 : f32 to vector<1x32xf32>
    %21 = arith.mulf %20, %19 : vector<1x32xf32>
    %22 = arith.addf %17, %21 : vector<1x32xf32>
    %c1 = arith.constant 1 : index
    %23 = memref.load %arg1[%c1] : memref<3xf32, #tpu.memory_space<smem>>
    %24 = vector.extract_strided_slice %16 {offsets = [0, 1], sizes = [1, 32], strides = [1, 1]} : vector<1x34xf32> to vector<1x32xf32>
    %25 = vector.broadcast %23 : f32 to vector<1x32xf32>
    %26 = arith.mulf %25, %24 : vector<1x32xf32>
    %27 = arith.addf %22, %26 : vector<1x32xf32>
    %c2 = arith.constant 2 : index
    %28 = memref.load %arg1[%c2] : memref<3xf32, #tpu.memory_space<smem>>
    %29 = vector.extract_strided_slice %16 {offsets = [0, 2], sizes = [1, 32], strides = [1, 1]} : vector<1x34xf32> to vector<1x32xf32>
    %30 = vector.broadcast %28 : f32 to vector<1x32xf32>
    %31 = arith.mulf %30, %29 : vector<1x32xf32>
    %32 = arith.addf %27, %31 : vector<1x32xf32>
    %33 = arith.negf %32 : vector<1x32xf32>
    %34 = math.exp %33 : vector<1x32xf32>
    %cst_7 = arith.constant 1.000000e+00 : f32
    %35 = vector.broadcast %cst_7 : f32 to vector<1x32xf32>
    %36 = arith.addf %35, %34 : vector<1x32xf32>
    %37 = arith.divf %35, %36 : vector<1x32xf32>
    %38 = tpu.concatenate %37, %37, %37, %37 in 1 : vector<1x32xf32>, vector<1x32xf32>, vector<1x32xf32>, vector<1x32xf32> -> vector<1x128xf32>
    %c0_8 = arith.constant 0 : index
    %c0_9 = arith.constant 0 : index
    %c0_10 = arith.constant 0 : index
    %39 = vector.load %arg2[%c0_8, %c0_9, %c0_10] : memref<1x64x128xf32, #tpu.memory_space<vmem>>, vector<1x64x128xf32>
    %40 = vector.shape_cast %39 : vector<1x64x128xf32> to vector<64x128xf32>
    %41 = vector.broadcast %38 : vector<1x128xf32> to vector<64x128xf32>
    %42 = arith.mulf %40, %41 : vector<64x128xf32>
    %c0_11 = arith.constant 0 : index
    %c0_12 = arith.constant 0 : index
    %c0_13 = arith.constant 0 : index
    %43 = vector.load %arg3[%c0_11, %c0_12, %c0_13] : memref<1x64x128xf32, #tpu.memory_space<vmem>>, vector<1x64x128xf32>
    %44 = vector.shape_cast %43 : vector<1x64x128xf32> to vector<64x128xf32>
    %45 = vector.shape_cast %42 : vector<64x128xf32> to vector<1x64x128xf32>
    tpu.vector_store %arg3[%c0_11, %c0_12, %c0_13], %45 {strides = array<i32>} : memref<1x64x128xf32, #tpu.memory_space<vmem>>, vector<1x64x128xf32>,
    return
  }
  func.func @transform_0(%arg0: i32) -> i32 {
    %c0_i32 = arith.constant 0 : i32
    %c0_i32_0 = arith.constant 0 : i32
    return %c0_i32 : i32
  }
  func.func @transform_1(%arg0: i32) -> (i32, i32, i32) {
    %c0_i32 = arith.constant 0 : i32
    %c0_i32_0 = arith.constant 0 : i32
    %c0_i32_1 = arith.constant 0 : i32
    return %arg0, %c0_i32, %c0_i32_0 : i32, i32, i32
  }
  func.func @transform_2(%arg0: i32) -> (i32, i32, i32) {
    %c0_i32 = arith.constant 0 : i32
    %c0_i32_0 = arith.constant 0 : i32
    %c0_i32_1 = arith.constant 0 : i32
    return %arg0, %c0_i32, %c0_i32_0 : i32, i32, i32
  }
}

</mosaic_0001>

<llo_original>
// kernel: tpu_custom_call.1
$region0: #{tpu_custom_call.1}
  #allocation0 [shape = 'u32[]', space=smem, size = 0x4, offset = 0x4, fixed_abs, tag = 'smem constant byte address 0x4 - core index']
  #allocation1 [shape = 'u32[144,128]{1,0:T(1,128)}', space=vmem, size = 0x12000, scoped, tag = 'internal scratch']
  %s0 = inlined_call_operand.hbm [shape: f32[3], index: 0, kind: input, shape index: {}]
  %s1 = inlined_call_operand.hbm [shape: f32[2,64,128], index: 1, kind: input, shape index: {}]
  %s2 = inlined_call_operand.hbm [shape: f32[2,64,128], index: 2, kind: output, shape index: {}]
  %s3 = sld [smem:[#allocation0]]
  $region49: #{tpu_custom_call.1} parent=0
    _
  %s5 = ssub.s32 1, %s3
  %s6 = scalar_select 0, %s5, %s3
  $region1: #{tpu_custom_call.1} parent=0
    #allocation2 [shape = 'u8[512]{0}', space=smem, size = 0x200, scoped, tag = 'input window, operand 0, single buffered']
    #allocation3 [shape = 's32[2]{0}', space=sflag, size = 0x8, scoped, tag = 'scoped memory for tpu_custom_call.1']
    #allocation4 [shape = 's32[2]{0}', space=sflag, size = 0x8, scoped, tag = 'scoped memory for tpu_custom_call.1']
    #allocation5 [shape = 's32[2]{0}', space=sflag, size = 0x8, scoped, tag = 'scoped memory for tpu_custom_call.1']
    #allocation6 [shape = 'u8[65536]{0}', space=vmem, size = 0x10000, scoped, tag = 'input window, operand 1']
    #allocation7 [shape = 'u8[65536]{0}', space=vmem, size = 0x10000, scoped, tag = 'output window, operand 0']
    %7 = vsyncpa [#allocation5], 0
    %8 = vsyncpa [#allocation3], 0
    %s9 = scalar_lea.sflag [#allocation3], 1
    %10 = vsyncpa %s9, 0
    %11 = vsyncpa [#allocation4], 0
    %s12 = scalar_lea.sflag [#allocation4], 1
    %13 = vsyncpa %s12, 0
    loop: start=0, step=1, limit=4
    $region2: #{tpu_custom_call.1} parent=1 // loop_pre_header
      _
    $region3: #{tpu_custom_call.1} parent=1 // loop_header
      %s15 = sphi 0, %s19
      %p16 = scmp.ge.s32.totalorder %s15, 4
      %s23 = sphi 0, %s23
      %s25 = sphi 0, %s23
      %s26 = sphi 0, %s25
      %s40 = sphi 0, %s26
      %s46 = sphi 0, %s48
      %s49 = sphi 0, %s46
      %s50 = sphi 0, %s49
      %s66 = sphi 0, %s50
      %s72 = sphi 0, %s74
      %s75 = sphi 0, %s72
      %s76 = sphi 0, %s75
      %s92 = sphi 0, %s76
    $region4: #{tpu_custom_call.1} parent=1 // loop_header_branch
      %18 = sbr.rel (%p16) target = $region8
    $region5: #{tpu_custom_call.1} parent=1 // loop_body
      %s20 = ssub.s32 %s15, 1
      %s21 = ssub.s32 %s15, 2
      %s22 = sadd.s32 %s15, 1
      %s24 = sadd.s32 %s23, 1
      %p27 = scmp.eq.s32.totalorder %s15, 1
      %p28 = scmp.ne.s32.totalorder %s23, %s25
      %p29 = scmp.eq.s32.totalorder %s15, 0
      %p30 = por %p28, %p29
      %p31 = scmp.ne.s32.totalorder %s23, %s25
      %p32 = scmp.eq.s32.totalorder %s20, 1
      %p33 = por %p31, %p32
      %p34 = scmp.ne.s32.totalorder %s25, %s26
      %p35 = scmp.eq.s32.totalorder %s20, 0
      %p36 = por %p34, %p35
      %p37 = scmp.ne.s32.totalorder %s25, %s26
      %p38 = scmp.eq.s32.totalorder %s21, 1
      %p39 = por %p37, %p38
      %p41 = scmp.ne.s32.totalorder %s26, %s40
      %p42 = scmp.eq.s32.totalorder %s21, 0
      %p43 = por %p41, %p42
      %s44 = ssub.s32 %s15, %s22
      %p45 = scmp.eq.s32.totalorder %s44, 0
      %s47 = sadd.s32 %s46, 1
      %s48 = scalar_select %p45, %s46, %s47
      %p51 = pneg %p45
      %p52 = scmp.eq.s32.totalorder %s15, 1
      %p53 = por %p51, %p52
      %p54 = scmp.ne.s32.totalorder %s46, %s49
      %p55 = scmp.eq.s32.totalorder %s15, 0
      %p56 = por %p54, %p55
      %p57 = scmp.ne.s32.totalorder %s46, %s49
      %p58 = scmp.eq.s32.totalorder %s20, 1
      %p59 = por %p57, %p58
      %p60 = scmp.ne.s32.totalorder %s49, %s50
      %p61 = scmp.eq.s32.totalorder %s20, 0
      %p62 = por %p60, %p61
      %p63 = scmp.ne.s32.totalorder %s49, %s50
      %p64 = scmp.eq.s32.totalorder %s21, 1
      %p65 = por %p63, %p64
      %p67 = scmp.ne.s32.totalorder %s50, %s66
      %p68 = scmp.eq.s32.totalorder %s21, 0
      %p69 = por %p67, %p68
      %s70 = ssub.s32 %s15, %s22
      %p71 = scmp.eq.s32.totalorder %s70, 0
      %s73 = sadd.s32 %s72, 1
      %s74 = scalar_select %p71, %s72, %s73
      %p77 = pneg %p71
      %p78 = scmp.eq.s32.totalorder %s15, 1
      %p79 = por %p77, %p78
      %p80 = scmp.ne.s32.totalorder %s72, %s75
      %p81 = scmp.eq.s32.totalorder %s15, 0
      %p82 = por %p80, %p81
      %p83 = scmp.ne.s32.totalorder %s72, %s75
      %p84 = scmp.eq.s32.totalorder %s20, 1
      %p85 = por %p83, %p84
      %p86 = scmp.ne.s32.totalorder %s75, %s76
      %p87 = scmp.eq.s32.totalorder %s20, 0
      %p88 = por %p86, %p87
      %p89 = scmp.ne.s32.totalorder %s75, %s76
      %p90 = scmp.eq.s32.totalorder %s21, 1
      %p91 = por %p89, %p90
      %p93 = scmp.ne.s32.totalorder %s76, %s92
      %p94 = scmp.eq.s32.totalorder %s21, 0
      %p95 = por %p93, %p94
      %p96 = scmp.le.s32.totalorder 1, %s15
      %p97 = scmp.lt.s32.totalorder %s15, 3
      %p98 = pnand %p96, %p97
      %p99 = pneg %p98
      // Predicated region
      $region9: #{tpu_custom_call.1} parent=5 // pred_check
        _
      $region10: #{tpu_custom_call.1} parent=5 // pred_check_branch
        %101 = sbr.rel (%p98) target = $region12
      $region11: #{tpu_custom_call.1} parent=5 // pred_region
        %s102 = ssub.s32 %s15, 1
        // Predicated region
        $region13: #{tpu_custom_call.1} parent=11 // pred_check
          %p103 = pneg %p36
        $region14: #{tpu_custom_call.1} parent=11 // pred_check_branch
          %105 = sbr.rel (%p103) target = $region16
        $region15: #{tpu_custom_call.1} parent=11 // pred_region
          %s107 = ssub.s32 16, 16
          %108 = vsyncadd [#allocation5], %s107
          %111 = dma.hbm_to_smem %s0, 16, [#allocation2], [#allocation5]
        $region16: #{tpu_custom_call.1} parent=11 // pred_fallthru
          _
      $region12: #{tpu_custom_call.1} parent=5 // pred_fallthru
        _
      %p112 = scmp.lt.s32.totalorder %s15, 2
      // Predicated region
      $region17: #{tpu_custom_call.1} parent=5 // pred_check
        %p113 = pneg %p112
      $region18: #{tpu_custom_call.1} parent=5 // pred_check_branch
        %115 = sbr.rel (%p113) target = $region20
      $region19: #{tpu_custom_call.1} parent=5 // pred_region
        // Predicated region
        $region21: #{tpu_custom_call.1} parent=19 // pred_check
          %p116 = pneg %p56
        $region22: #{tpu_custom_call.1} parent=19 // pred_check_branch
          %118 = sbr.rel (%p116) target = $region24
        $region23: #{tpu_custom_call.1} parent=19 // pred_region
          %s119 = sand.u32 %s46, 1
          %s120 = scalar_lea.sflag [#allocation3], %s119
          %s121 = sand.u32 %s46, 1
          %s122 = smul.addr %s121, 64
          %s123 = scalar_lea.vmem [#allocation6], %s122
          %s125 = ssub.s32 1024, 1024
          %126 = vsyncadd %s120, %s125
          %s127 = smul.addr %s15, 8
          %s128 = smul.addr %s127, 128
          %s129 = scalar_lea.hbm %s1, %s128
          %s130 = sshll.u32 %s123, 4
          %s131 = int_to_ptr.vmem [resolvable:$true] %s130
          %136 = dma.hbm_to_vmem [thread:$0]  %s129, 1024, %s131, %s120, 128, 128, 8
        $region24: #{tpu_custom_call.1} parent=19 // pred_fallthru
          _
      $region20: #{tpu_custom_call.1} parent=5 // pred_fallthru
        _
      %p137 = scmp.le.s32.totalorder 1, %s15
      %p138 = scmp.lt.s32.totalorder %s15, 3
      %p139 = pnand %p137, %p138
      %p140 = pneg %p139
      // Predicated region
      $region25: #{tpu_custom_call.1} parent=5 // pred_check
        _
      $region26: #{tpu_custom_call.1} parent=5 // pred_check_branch
        %142 = sbr.rel (%p139) target = $region28
      $region27: #{tpu_custom_call.1} parent=5 // pred_region
        %s143 = ssub.s32 %s15, 1
        // Predicated region
        $region29: #{tpu_custom_call.1} parent=27 // pred_check
          %p144 = pneg %p36
        $region30: #{tpu_custom_call.1} parent=27 // pred_check_branch
          %146 = sbr.rel (%p144) target = $region32
        $region31: #{tpu_custom_call.1} parent=27 // pred_region
          %147 = dma.done [#allocation5], 16
        $region32: #{tpu_custom_call.1} parent=27 // pred_fallthru
          _
        %s148 = sand.u32 %s49, 1
        %s149 = scalar_lea.sflag [#allocation3], %s148
        %s150 = sand.u32 %s49, 1
        %s151 = smul.addr %s150, 64
        %s152 = scalar_lea.vmem [#allocation6], %s151
        // Predicated region
        $region33: #{tpu_custom_call.1} parent=27 // pred_check
          %p153 = pneg %p62
        $region34: #{tpu_custom_call.1} parent=27 // pred_check_branch
          %155 = sbr.rel (%p153) target = $region36
        $region35: #{tpu_custom_call.1} parent=27 // pred_region
          %156 = dma.done %s149, 1024
        $region36: #{tpu_custom_call.1} parent=27 // pred_fallthru
          _
        %157 = sfence
        %p158 = pneg %p36
        %p159 = pneg %p33
        %s160 = sand.u32 %s49, 1
        %s161 = scalar_lea.sflag [#allocation3], %s160
        %s162 = sand.u32 %s49, 1
        %s163 = smul.addr %s162, 64
        %s164 = scalar_lea.vmem [#allocation6], %s163
        %p165 = pneg %p62
        %p166 = pneg %p59
        %p167 = pneg %p88
        %p168 = pneg %p85
        %s169 = sand.u32 %s75, 1
        %s170 = scalar_lea.sflag [#allocation4], %s169
        %s171 = sand.u32 %s75, 1
        %s172 = smul.addr %s171, 64
        %s173 = scalar_lea.vmem [#allocation7], %s172
        %v174 = vld [vmem:[%s152] sm:$0xff]
        %v175 = vld [vmem:[%s152 + $0x8] sm:$0xff]
        %v176 = vld [vmem:[%s152 + $0x10] sm:$0xff]
        %v177 = vld [vmem:[%s152 + $0x18] sm:$0xff]
        %v178 = vld [vmem:[%s152 + $0x20] sm:$0xff]
        %v179 = vld [vmem:[%s152 + $0x28] sm:$0xff]
        %v180 = vld [vmem:[%s152 + $0x30] sm:$0xff]
        %v181 = vld [vmem:[%s152 + $0x38] sm:$0xff]
        %v182 = vadd.f32 %v174, %v175
        %v183 = vadd.f32 %v182, %v176
        %v184 = vadd.f32 %v183, %v177
        %v185 = vadd.f32 %v184, %v178
        %v186 = vadd.f32 %v185, %v179
        %v187 = vadd.f32 %v186, %v180
        %v188 = vadd.f32 %v187, %v181
        %v189 = vrot.slane %v188, 4
        %v190 = vadd.f32 %v188, %v189
        %v191 = vrot.slane %v190, 2
        %v192 = vadd.f32 %v190, %v191
        %v193 = vrot.slane %v192, 1
        %v194 = vadd.f32 %v192, %v193
        %v195 = vadd.f32 %v194, 0.0
        %197 = vrot.lane.b32.xlu0 %v194, 96
        %v198 = vpop.permute.xlu0 %197
        %v200 = vadd.f32 %v195, %v198
        %201 = vrot.lane.b32.xlu0 %v194, 64
        %v202 = vpop.permute.xlu0 %201
        %v204 = vadd.f32 %v200, %v202
        %205 = vrot.lane.b32.xlu0 %v194, 32
        %v206 = vpop.permute.xlu0 %205
        %v208 = vadd.f32 %v204, %v206
        %v209 = vmul.f32 %v208, 0.00390625
        %211 = vrot.lane.b32.xlu0 %v209, 1
        %v212 = vpop.permute.xlu0 %211
        %vm214 = vcmask 7168
        %v215 = vsel %vm214, 0.0, %v212
        %vm216 = vcmask 269312
        %v217 = vsel %vm216, %v215, 0.0
        %s218 = sld [smem:[#allocation2]]
        %v219 = vstv %s218
        %v220 = vmul.f32 %v219, %v217
        %v221 = vadd.f32 %v220, 0.0
        %s222 = sld [smem:[#allocation2 + $0x1]]
        %v223 = vstv %s222
        %v224 = vmul.f32 %v223, %v217
        %226 = vrot.lane.b32.xlu0 %v224, 127
        %v227 = vpop.permute.xlu0 %226
        %v229 = vadd.f32 %v221, %v227
        %s230 = sld [smem:[#allocation2 + $0x2]]
        %v231 = vstv %s230
        %v232 = vmul.f32 %v231, %v217
        %234 = vrot.lane.b32.xlu0 %v232, 126
        %v235 = vpop.permute.xlu0 %234
        %v237 = vadd.f32 %v229, %v235
        %v238 = vxor.u32 %v237, 2147483648
        %v239 = vmul.f32 %v238, 1.442695
        %v240 = vpow.pop %v239
        %v241 = vadd.f32 %v240, 1.0
        %v242 = vrcp.pop %v241
        %v243 = vmul.f32 1.0, %v242
        %245 = vrot.lane.b32.xlu0 %v243, 32
        %v246 = vpop.permute.xlu0 %245
        %248 = vrot.lane.b32.xlu0 %v243, 64
        %v249 = vpop.permute.xlu0 %248
        %251 = vrot.lane.b32.xlu0 %v243, 96
        %v252 = vpop.permute.xlu0 %251
        %vm254 = vcmask 261120
        %v255 = vsel %vm254, %v243, %v246
        %vm256 = vcmask 523264
        %v257 = vsel %vm256, %v255, %v249
        %vm258 = vcmask 785408
        %v259 = vsel %vm258, %v257, %v252
        %v260 = vlaneseq
        %v261 = vshrl.u32 %v260, 7
        %v262 = vsub.s32 0, %v261
        %v263 = vrot.slane %v259, %v262
        %v264 = vmul.f32 %v174, %v263
        %v265 = vmul.f32 %v175, %v263
        %v266 = vmul.f32 %v176, %v263
        %v267 = vmul.f32 %v177, %v263
        %v268 = vmul.f32 %v178, %v263
        %v269 = vmul.f32 %v179, %v263
        %v270 = vmul.f32 %v180, %v263
        %v271 = vmul.f32 %v181, %v263
        %272 = vst [vmem:[%s173] sm:$0xff] %v264
        %273 = vst [vmem:[%s173 + $0x8] sm:$0xff] %v265
        %274 = vst [vmem:[%s173 + $0x10] sm:$0xff] %v266
        %275 = vst [vmem:[%s173 + $0x18] sm:$0xff] %v267
        %276 = vst [vmem:[%s173 + $0x20] sm:$0xff] %v268
        %277 = vst [vmem:[%s173 + $0x28] sm:$0xff] %v269
        %278 = vst [vmem:[%s173 + $0x30] sm:$0xff] %v270
        %279 = vst [vmem:[%s173 + $0x38] sm:$0xff] %v271
        %s280 = sand.u32 %s75, 1
        %s281 = scalar_lea.sflag [#allocation4], %s280
        %s282 = sand.u32 %s75, 1
        %s283 = smul.addr %s282, 64
        %s284 = scalar_lea.vmem [#allocation7], %s283
        // Predicated region
        $region37: #{tpu_custom_call.1} parent=27 // pred_check
          %p285 = pneg %p85
        $region38: #{tpu_custom_call.1} parent=27 // pred_check_branch
          %287 = sbr.rel (%p285) target = $region40
        $region39: #{tpu_custom_call.1} parent=27 // pred_region
          %s289 = ssub.s32 1024, 1024
          %290 = vsyncadd %s281, %s289
          %s291 = smul.addr %s20, 8
          %s292 = smul.addr %s291, 128
          %s293 = scalar_lea.hbm %s2, %s292
          %s294 = sshll.u32 %s284, 4
          %s295 = int_to_ptr.vmem [resolvable:$true] %s294
          %300 = dma.vmem_to_hbm [thread:$0]  %s295, 1024, %s293, %s281, 128, 128, 8
        $region40: #{tpu_custom_call.1} parent=27 // pred_fallthru
          _
      $region28: #{tpu_custom_call.1} parent=5 // pred_fallthru
        _
      %p301 = scmp.le.s32.totalorder 2, %s15
      // Predicated region
      $region41: #{tpu_custom_call.1} parent=5 // pred_check
        %p302 = pneg %p301
      $region42: #{tpu_custom_call.1} parent=5 // pred_check_branch
        %304 = sbr.rel (%p302) target = $region44
      $region43: #{tpu_custom_call.1} parent=5 // pred_region
        %s305 = ssub.s32 %s15, 2
        // Predicated region
        $region45: #{tpu_custom_call.1} parent=43 // pred_check
          %p306 = pneg %p91
        $region46: #{tpu_custom_call.1} parent=43 // pred_check_branch
          %308 = sbr.rel (%p306) target = $region48
        $region47: #{tpu_custom_call.1} parent=43 // pred_region
          %s309 = sand.u32 %s76, 1
          %s310 = scalar_lea.sflag [#allocation4], %s309
          %s311 = sand.u32 %s76, 1
          %s312 = smul.addr %s311, 64
          %s313 = scalar_lea.vmem [#allocation7], %s312
          %314 = dma.done %s310, 1024
        $region48: #{tpu_custom_call.1} parent=43 // pred_fallthru
          _
      $region44: #{tpu_custom_call.1} parent=5 // pred_fallthru
        _
    $region6: #{tpu_custom_call.1} parent=1 // loop_footer
      %s19 = sadd.s32 1, %s15
    $region7: #{tpu_custom_call.1} parent=1 // loop_footer_branch
      %14 = sbr.rel target = $region3
    $region8: #{tpu_custom_call.1} parent=1 // loop_exit
      _
    %315 = vsyncpa [#allocation3], 1
    %s316 = scalar_lea.sflag [#allocation3], 1
    %317 = vsyncpa %s316, 1
    %318 = vsyncpa [#allocation4], 1
    %s319 = scalar_lea.sflag [#allocation4], 1
    %320 = vsyncpa %s319, 1
    %321 = vsyncpa [#allocation5], 1
    %s322 = scalar_lea.sflag [#allocation5], 1
    %323 = vsyncpa %s322, 1

</llo_original>
